<compile_context>
chip_gen: v7x
topology: tpu7x:2x2x1
jax: 0.10.0
libtpu: 0.0.40
codegen_flags: <defaults>
</compile_context>

<pallas_src>
import functools
import math

import jax
import jax.numpy as jnp
from jax.experimental import pallas as pl
from jax.experimental.pallas import tpu as pltpu


_VMEM_SPEC = pl.BlockSpec(memory_space=pltpu.MemorySpace.VMEM)


# -----------------------------------------------------------------------------
# In-kernel helpers (traced inside Pallas kernels only)
# -----------------------------------------------------------------------------
def _ln(x, g, b, eps=1e-12):
    mu = jnp.mean(x, axis=-1, keepdims=True)
    xc = x - mu
    var = jnp.mean(xc * xc, axis=-1, keepdims=True)
    return xc * jax.lax.rsqrt(var + eps) * g + b


def _gelu(x):
    # TODO(synk): HF BertModel's default GELU is the exact erf form; tanh approx here.
    return 0.5 * x * (1.0 + jnp.tanh(0.7978845608028654 * (x + 0.044715 * x * x * x)))


def _mm3(x, w):
    # (B, S, K) @ (K, N) -> (B, S, N) on the MXU, f32 accumulate.
    return jax.lax.dot_general(
        x, w, dimension_numbers=(((2,), (0,)), ((), ())),
        preferred_element_type=jnp.float32)


# -----------------------------------------------------------------------------
# Kernel 1: embedding LayerNorm (runs once, tiny)
# -----------------------------------------------------------------------------
def _layernorm_kernel(x_ref, g_ref, b_ref, o_ref):
    o_ref[...] = _ln(x_ref[...].astype(jnp.float32), g_ref[...], b_ref[...])


def layernorm(x, g, b):
    h = x.shape[-1]
    bshape = (1,) * (x.ndim - 1) + (h,)
    return pl.pallas_call(
        _layernorm_kernel,
        in_specs=[_VMEM_SPEC] * 3,
        out_specs=_VMEM_SPEC,
        out_shape=jax.ShapeDtypeStruct(x.shape, jnp.float32),
    )(x, g.reshape(bshape), b.reshape(bshape))


# -----------------------------------------------------------------------------
# Kernel 2: one fully fused BERT encoder layer, all intermediates VMEM-resident
# -----------------------------------------------------------------------------
def _encoder_layer_kernel(x_ref, bias_ref, wqkv_ref, bqkv_ref, wo_ref, bo_ref,
                          ln1g_ref, ln1b_ref, w1_ref, b1_ref, w2_ref, b2_ref,
                          ln2g_ref, ln2b_ref, o_ref, *, nh, dh):
    h = nh * dh
    scale = 1.0 / math.sqrt(dh)

    x = x_ref[...].astype(jnp.float32)                    # (B, S, H)
    bias = bias_ref[...]                                  # (B, 1, S), broadcast in-kernel

    # Fused QKV projection: single MXU pass with N = 3H.
    qkv = _mm3(x, wqkv_ref[...]) + bqkv_ref[...]          # (B, S, 3H)

    # Per-head attention; heads are static lane slices of the fused QKV output.
    proj = None
    for head in range(nh):
        q = qkv[:, :, head * dh:(head + 1) * dh]          # (B, S, dh)
        k = qkv[:, :, h + head * dh:h + (head + 1) * dh]
        v = qkv[:, :, 2 * h + head * dh:2 * h + (head + 1) * dh]

        scores = jnp.einsum("bqd,bkd->bqk", q, k,
                            preferred_element_type=jnp.float32) * scale + bias
        scores = scores - jnp.max(scores, axis=-1, keepdims=True)
        p = jnp.exp(scores)
        p = p * pl.reciprocal(jnp.sum(p, axis=-1, keepdims=True), approx=True)
        ctx = jnp.einsum("bqk,bkd->bqd", p, v,
                         preferred_element_type=jnp.float32)      # (B, S, dh)

        # Head-major output projection: equivalent to concat(heads) @ Wo.
        contrib = _mm3(ctx, wo_ref[head])                          # (B, S, H)
        proj = contrib if proj is None else proj + contrib
    proj = proj + bo_ref[...]

    x = _ln(x + proj, ln1g_ref[...], ln1b_ref[...])

    hid = _gelu(_mm3(x, w1_ref[...]) + b1_ref[...])                # (B, S, FFN)
    ffn_out = _mm3(hid, w2_ref[...]) + b2_ref[...]                 # (B, S, H)
    o_ref[...] = _ln(x + ffn_out, ln2g_ref[...], ln2b_ref[...])


def encoder_layer(x, attn_bias, lp, *, nh, dh):
    args = (x, attn_bias,
            lp["wqkv"], lp["bqkv"], lp["wo_hm"], lp["bo"],
            lp["attn_ln_g"], lp["attn_ln_b"],
            lp["w1"], lp["b1"], lp["w2"], lp["b2"],
            lp["ffn_ln_g"], lp["ffn_ln_b"])
    return pl.pallas_call(
        functools.partial(_encoder_layer_kernel, nh=nh, dh=dh),
        in_specs=[_VMEM_SPEC] * len(args),
        out_specs=_VMEM_SPEC,
        out_shape=jax.ShapeDtypeStruct(x.shape, jnp.float32),
    )(*args)


# -----------------------------------------------------------------------------
# Kernel 3: CNN classification head (im2col conv + ReLU + max-pool + concat + fc)
# -----------------------------------------------------------------------------
def _cnn_head_kernel(*refs, filter_sizes, s_len):
    n = len(filter_sizes)
    enc_ref = refs[0]
    conv_w = refs[1:1 + n]              # each (fs*H, F), im2col layout
    conv_b = refs[1 + n:1 + 2 * n]      # each (1, F)
    wfc_ref = refs[1 + 2 * n]
    bfc_ref = refs[2 + 2 * n]
    out_ref = refs[3 + 2 * n]

    enc = enc_ref[...].astype(jnp.float32)               # (B, S, H)

    pooled = []
    for i, fs in enumerate(filter_sizes):
        t_out = s_len - fs + 1
        # im2col slab: (B, T, fs*H) -> one MXU matmul with K = fs*H.
        win = jnp.concatenate(
            [enc[:, kk:kk + t_out, :] for kk in range(fs)], axis=-1)
        conv = _mm3(win, conv_w[i][...])                  # (B, T, F)
        conv = jnp.maximum(conv + conv_b[i][...], 0.0)    # ReLU
        pooled.append(jnp.max(conv, axis=1))              # max_pool1d over full length
    feats = jnp.concatenate(pooled, axis=1)               # (B, n*F)
    # TODO(synk): nn.Dropout is identity at inference; no stochastic drop applied.
    out_ref[...] = (jnp.dot(feats, wfc_ref[...],
                            preferred_element_type=jnp.float32) + bfc_ref[...])


def cnn_classifier(enc, conv_ws, conv_bs, fc_w, fc_b, filter_sizes):
    b, s, _ = enc.shape
    class_num = fc_w.shape[1]
    args = [enc] + list(conv_ws) + list(conv_bs) + [fc_w, fc_b]
    return pl.pallas_call(
        functools.partial(_cnn_head_kernel,
                          filter_sizes=tuple(filter_sizes), s_len=s),
        in_specs=[_VMEM_SPEC] * len(args),
        out_specs=_VMEM_SPEC,
        out_shape=jax.ShapeDtypeStruct((b, class_num), jnp.float32),
    )(*args)


# -----------------------------------------------------------------------------
# Parameter init (deterministic, synthetic — no checkpoint load).  Weights are
# generated in the PyTorch layout and repacked once into the fused layouts the
# kernels consume (wq|wk|wv -> (H,3H); wo -> (nh,dh,H); conv -> im2col (fs*H,F)).
# -----------------------------------------------------------------------------
def init_params(key, cfg):
    h, f, ffn = cfg["hidden"], cfg["filter_num"], cfg["ffn"]
    nh = cfg["heads"]
    dh = h // nh
    ks = iter(jax.random.split(key, 128))
    n01 = lambda shape: 0.02 * jax.random.normal(next(ks), shape, dtype=jnp.float32)

    params = {
        "word_emb": n01((cfg["vocab_size"], h)),
        "pos_emb": n01((cfg["pad_size"], h)),
        "type_emb": n01((2, h)),
        "emb_ln_g": jnp.ones((h,), jnp.float32),
        "emb_ln_b": jnp.zeros((h,), jnp.float32),
        "layers": [],
    }
    for _ in range(cfg["layers"]):
        wq, wk, wv, wo = n01((h, h)), n01((h, h)), n01((h, h)), n01((h, h))
        params["layers"].append({
            "wqkv": jnp.concatenate([wq, wk, wv], axis=1),   # fused QKV (H, 3H)
            "bqkv": jnp.zeros((1, 3 * h), jnp.float32),
            "wo_hm": wo.reshape(nh, dh, h),                  # head-major out proj
            "bo": jnp.zeros((1, h), jnp.float32),
            "attn_ln_g": jnp.ones((1, h), jnp.float32),
            "attn_ln_b": jnp.zeros((1, h), jnp.float32),
            "w1": n01((h, ffn)), "b1": jnp.zeros((1, ffn), jnp.float32),
            "w2": n01((ffn, h)), "b2": jnp.zeros((1, h), jnp.float32),
            "ffn_ln_g": jnp.ones((1, h), jnp.float32),
            "ffn_ln_b": jnp.zeros((1, h), jnp.float32),
        })
    # torch Conv2d(1, F, (fs, H)) weight (F, 1, fs, H) -> im2col layout (fs*H, F)
    params["conv_ws"] = [n01((f, fs, h)).transpose(1, 2, 0).reshape(fs * h, f)
                         for fs in cfg["filter_sizes"]]
    params["conv_bs"] = [jnp.zeros((1, f), jnp.float32) for _ in cfg["filter_sizes"]]
    params["fc_w"] = n01((len(cfg["filter_sizes"]) * f, cfg["class_num"]))
    params["fc_b"] = jnp.zeros((1, cfg["class_num"]), jnp.float32)
    return params


# -----------------------------------------------------------------------------
# Forward = BERT encoder (synthetic weights) + CNN classification head
# -----------------------------------------------------------------------------
def bert_cnn_forward(params, context, mask, cfg):
    b, s = context.shape
    h, nh = cfg["hidden"], cfg["heads"]
    dh = h // nh

    # Embedding gather (data-dependent vocab lookup -> plain-JAX glue).
    x = (jnp.take(params["word_emb"], context, axis=0)
         + params["pos_emb"][None, :s, :]
         + params["type_emb"][0][None, None, :])
    x = layernorm(x, params["emb_ln_g"], params["emb_ln_b"])          # (B, S, H)

    # Additive attention-mask bias kept at (B, 1, S); broadcast happens in-kernel.
    attn_bias = ((1.0 - mask.astype(jnp.float32)) * (-1e9))[:, None, :]

    for lp in params["layers"]:
        x = encoder_layer(x, attn_bias, lp, nh=nh, dh=dh)

    encoder_out = x  # (B, S, H); pooled output is unused by BERT_CNN.forward

    return cnn_classifier(encoder_out, params["conv_ws"], params["conv_bs"],
                          params["fc_w"], params["fc_b"], cfg["filter_sizes"])


# -----------------------------------------------------------------------------
if __name__ == "__main__":
    cfg = dict(
        vocab_size=100,
        pad_size=8,               # sequence length
        hidden=32,                # args.bert_hidden_size
        heads=4,
        ffn=64,
        layers=1,
        filter_sizes=(2, 3, 4),   # args.filter_sizes = "2,3,4"
        filter_num=8,             # args.filter_num
        class_num=5,              # args.class_num
    )
    key = jax.random.PRNGKey(0)
    kp, kc = jax.random.split(key)
    params = init_params(kp, cfg)

    batch = 2
    context = jax.random.randint(kc, (batch, cfg["pad_size"]), 0,
                                 cfg["vocab_size"], dtype=jnp.int32)
    lengths = jnp.array([8, 6], dtype=jnp.int32)
    mask = (jnp.arange(cfg["pad_size"])[None, :] < lengths[:, None]).astype(jnp.int32)
    x = (context, lengths, mask)   # matches the (tokens, lengths, mask) tuple input

    logits = bert_cnn_forward(params, x[0], x[2], cfg)
    jax.block_until_ready(logits)
    assert logits.shape == (batch, cfg["class_num"]) and logits.dtype == jnp.float32
    print("KERNEL_OK")
</pallas_src>

<mosaic_0001>
module attributes {stable_mosaic.version = 11 : i64} {
  func.func @_layernorm_kernel(%arg0: memref<2x8x32xf32, #tpu.memory_space<vmem>>, %arg1: memref<1x1x32xf32, #tpu.memory_space<vmem>>, %arg2: memref<1x1x32xf32, #tpu.memory_space<vmem>>, %arg3: memref<2x8x32xf32, #tpu.memory_space<vmem>>) attributes {dimension_semantics = [], scalar_prefetch = 0 : i64, scratch_operands = 0 : i64, tpu.core_type = #tpu.core_type<tc>} {
    %c0 = arith.constant 0 : index
    %c0_0 = arith.constant 0 : index
    %c0_1 = arith.constant 0 : index
    %0 = vector.load %arg0[%c0, %c0_0, %c0_1] : memref<2x8x32xf32, #tpu.memory_space<vmem>>, vector<2x8x32xf32>
    %c0_2 = arith.constant 0 : index
    %c0_3 = arith.constant 0 : index
    %c0_4 = arith.constant 0 : index
    %1 = vector.load %arg1[%c0_2, %c0_3, %c0_4] : memref<1x1x32xf32, #tpu.memory_space<vmem>>, vector<1x1x32xf32>
    %c0_5 = arith.constant 0 : index
    %c0_6 = arith.constant 0 : index
    %c0_7 = arith.constant 0 : index
    %2 = vector.load %arg2[%c0_5, %c0_6, %c0_7] : memref<1x1x32xf32, #tpu.memory_space<vmem>>, vector<1x1x32xf32>
    %cst = arith.constant dense<0.000000e+00> : vector<2x8xf32>
    %3 = vector.multi_reduction <add>, %0, %cst [2] : vector<2x8x32xf32> to vector<2x8xf32>
    %4 = vector.shape_cast %3 : vector<2x8xf32> to vector<2x8x1xf32>
    %cst_8 = arith.constant 3.200000e+01 : f32
    %5 = vector.broadcast %cst_8 : f32 to vector<2x8x1xf32>
    %6 = arith.divf %4, %5 : vector<2x8x1xf32>
    %7 = vector.broadcast %6 : vector<2x8x1xf32> to vector<2x8x32xf32>
    %8 = arith.subf %0, %7 : vector<2x8x32xf32>
    %9 = arith.mulf %8, %8 : vector<2x8x32xf32>
    %cst_9 = arith.constant dense<0.000000e+00> : vector<2x8xf32>
    %10 = vector.multi_reduction <add>, %9, %cst_9 [2] : vector<2x8x32xf32> to vector<2x8xf32>
    %11 = vector.shape_cast %10 : vector<2x8xf32> to vector<2x8x1xf32>
    %cst_10 = arith.constant 3.200000e+01 : f32
    %12 = vector.broadcast %cst_10 : f32 to vector<2x8x1xf32>
    %13 = arith.divf %11, %12 : vector<2x8x1xf32>
    %cst_11 = arith.constant 9.99999996E-13 : f32
    %14 = vector.broadcast %cst_11 : f32 to vector<2x8x1xf32>
    %15 = arith.addf %13, %14 : vector<2x8x1xf32>
    %16 = math.rsqrt %15 : vector<2x8x1xf32>
    %17 = vector.broadcast %16 : vector<2x8x1xf32> to vector<2x8x32xf32>
    %18 = arith.mulf %8, %17 : vector<2x8x32xf32>
    %19 = vector.broadcast %1 : vector<1x1x32xf32> to vector<2x8x32xf32>
    %20 = arith.mulf %18, %19 : vector<2x8x32xf32>
    %21 = vector.broadcast %2 : vector<1x1x32xf32> to vector<2x8x32xf32>
    %22 = arith.addf %20, %21 : vector<2x8x32xf32>
    %c0_12 = arith.constant 0 : index
    %c0_13 = arith.constant 0 : index
    %c0_14 = arith.constant 0 : index
    %23 = vector.load %arg3[%c0_12, %c0_13, %c0_14] : memref<2x8x32xf32, #tpu.memory_space<vmem>>, vector<2x8x32xf32>
    tpu.vector_store %arg3[%c0_12, %c0_13, %c0_14], %22 {strides = array<i32>} : memref<2x8x32xf32, #tpu.memory_space<vmem>>, vector<2x8x32xf32>,
    return
  }
}

</mosaic_0001>

<llo_original>
// kernel: tpu_custom_call.1
$region0: #{tpu_custom_call.1}
  #allocation0 [shape = 'u32[]', space=smem, size = 0x4, offset = 0x4, fixed_abs, tag = 'smem constant byte address 0x4 - core index']
  #allocation1 [shape = 'u32[144,128]{1,0:T(1,128)}', space=vmem, size = 0x12000, scoped, tag = 'internal scratch']
  %s0 = inlined_call_operand.hbm [shape: f32[2,8,32], index: 0, kind: input, shape index: {}]
  %s1 = inlined_call_operand.vmem [shape: f32[1,1,32], index: 1, kind: input, shape index: {}]
  %s2 = inlined_call_operand.vmem [shape: f32[1,1,32], index: 2, kind: input, shape index: {}]
  %s3 = inlined_call_operand.hbm [shape: f32[2,8,32], index: 3, kind: output, shape index: {}]
  %s4 = sld [smem:[#allocation0]]
  $region26: #{tpu_custom_call.1} parent=0
    _
  %s6 = ssub.s32 1, %s4
  %s7 = scalar_select 0, %s6, %s4
  $region1: #{tpu_custom_call.1} parent=0
    #allocation2 [shape = 'u8[8192]{0}', space=vmem, size = 0x2000, scoped, tag = 'input window, operand 0, single buffered']
    #allocation3 [shape = 's32[1]{0}', space=sflag, size = 0x4, scoped, tag = 'scoped memory for tpu_custom_call.1']
    #allocation4 [shape = 's32[1]{0}', space=sflag, size = 0x4, scoped, tag = 'scoped memory for tpu_custom_call.1']
    #allocation5 [shape = 'u8[8192]{0}', space=vmem, size = 0x2000, scoped, tag = 'output window, operand 0, single buffered']
    %8 = vsyncpa [#allocation3], 0
    %9 = vsyncpa [#allocation4], 0
    // Predicated region
    $region2: #{tpu_custom_call.1} parent=1 // pred_check
      _
    $region3: #{tpu_custom_call.1} parent=1 // pred_check_branch
      %11 = sbr.rel (0) target = $region5
    $region4: #{tpu_custom_call.1} parent=1 // pred_region
      %s13 = ssub.s32 256, 256
      %14 = vsyncadd [#allocation3], %s13
      %s15 = sshll.u32 [#allocation2], 4
      %s16 = int_to_ptr.vmem [resolvable:$true] %s15
      %21 = dma.hbm_to_vmem [thread:$0]  %s0, 256, %s16, [#allocation3], 128, 128, 8
    $region5: #{tpu_custom_call.1} parent=1 // pred_fallthru
      _
    // Predicated region
    $region6: #{tpu_custom_call.1} parent=1 // pred_check
      _
    $region7: #{tpu_custom_call.1} parent=1 // pred_check_branch
      %23 = sbr.rel (0) target = $region9
    $region8: #{tpu_custom_call.1} parent=1 // pred_region
      _
    $region9: #{tpu_custom_call.1} parent=1 // pred_fallthru
      _
    // Predicated region
    $region10: #{tpu_custom_call.1} parent=1 // pred_check
      _
    $region11: #{tpu_custom_call.1} parent=1 // pred_check_branch
      %25 = sbr.rel (0) target = $region13
    $region12: #{tpu_custom_call.1} parent=1 // pred_region
      _
    $region13: #{tpu_custom_call.1} parent=1 // pred_fallthru
      _
    // Predicated region
    $region14: #{tpu_custom_call.1} parent=1 // pred_check
      _
    $region15: #{tpu_custom_call.1} parent=1 // pred_check_branch
      %27 = sbr.rel (0) target = $region17
    $region16: #{tpu_custom_call.1} parent=1 // pred_region
      %28 = dma.done [#allocation3], 256
    $region17: #{tpu_custom_call.1} parent=1 // pred_fallthru
      _
    %v29 = vld [vmem:[#allocation2] sm:$0xff]
    %v30 = vld [vmem:[#allocation2 + $0x8] sm:$0xff]
    %v31 = vld [vmem:[%s1] sm:$0x1]
    %v32 = vld [vmem:[%s2] sm:$0x1]
    %vm33 = vcmask 261120
    %v34 = vsel %vm33, %v29, 0.0
    %35 = vadd.xlane.f32.xlu0 %v34
    %v36 = vpop.xlane.xlu0 %35
    %v37 = vsel %vm33, %v30, 0.0
    %38 = vadd.xlane.f32.xlu0 %v37
    %v39 = vpop.xlane.xlu0 %38
    %v40 = vrcp.pop 32.0
    %v41 = vmul.f32 %v36, %v40
    %v42 = vmul.f32 %v39, %v40
    %v43 = vsub.f32 %v29, %v41
    %v44 = vsub.f32 %v30, %v42
    %v45 = vmul.f32 %v43, %v43
    %v46 = vmul.f32 %v44, %v44
    %v47 = vsel %vm33, %v45, 0.0
    %48 = vadd.xlane.f32.xlu0 %v47
    %v49 = vpop.xlane.xlu0 %48
    %v50 = vsel %vm33, %v46, 0.0
    %51 = vadd.xlane.f32.xlu0 %v50
    %v52 = vpop.xlane.xlu0 %51
    %v53 = vmul.f32 %v49, %v40
    %v54 = vmul.f32 %v52, %v40
    %v55 = vadd.f32 %v53, 1e-12
    %v56 = vadd.f32 %v54, 1e-12
    %v57 = vrsqrt.pop %v55
    %v58 = vrsqrt.pop %v56
    %v59 = vmul.f32 %v43, %v57
    %v60 = vmul.f32 %v44, %v58
    %v62 = vlaneseq
    %v63 = vshrl.u32 %v62, 7
    %v64 = vsub.s32 0, %v63
    %v65 = vrot.slane %v31, %v64
    %v67 = vmul.f32 %v59, %v65
    %v68 = vmul.f32 %v60, %v65
    %v70 = vlaneseq
    %v71 = vshrl.u32 %v70, 7
    %v72 = vsub.s32 0, %v71
    %v73 = vrot.slane %v32, %v72
    %v75 = vadd.f32 %v67, %v73
    %v76 = vadd.f32 %v68, %v73
    %77 = vst.msk [vmem:[#allocation5] sm:$0xff] %vm33, %v75
    %78 = vst.msk [vmem:[#allocation5 + $0x8] sm:$0xff] %vm33, %v76
    // Predicated region
    $region18: #{tpu_custom_call.1} parent=1 // pred_check
      _
    $region19: #{tpu_custom_call.1} parent=1 // pred_check_branch
      %80 = sbr.rel (0) target = $region21
    $region20: #{tpu_custom_call.1} parent=1 // pred_region
      %s82 = ssub.s32 256, 256
      %83 = vsyncadd [#allocation4], %s82
      %s84 = sshll.u32 [#allocation5], 4
      %s85 = int_to_ptr.vmem [resolvable:$true] %s84
      %90 = dma.vmem_to_hbm [thread:$0]  %s85, 256, %s3, [#allocation4], 128, 128, 8
    $region21: #{tpu_custom_call.1} parent=1 // pred_fallthru
      _
    // Predicated region
    $region22: #{tpu_custom_call.1} parent=1 // pred_check
      _
    $region23: #{tpu_custom_call.1} parent=1 // pred_check_branch
      %92 = sbr.rel (0) target = $region25
    $region24: #{tpu_custom_call.1} parent=1 // pred_region
      %93 = dma.done [#allocation4], 256
    $region25: #{tpu_custom_call.1} parent=1 // pred_fallthru
      _
    %94 = vsyncpa [#allocation3], 1
    %95 = vsyncpa [#allocation4], 1

</llo_original>
